<compile_context>
chip_gen: v5e
topology: v5e:2x2
jax: 0.10.0
libtpu: 0.0.40
codegen_flags: <defaults>
</compile_context>

<pallas_src>
import math
import numpy as np

import jax
import jax.numpy as jnp
from jax import lax
from jax.experimental import pallas as pl
from jax.experimental.pallas import tpu as pltpu

DEFAULT_SAMPLE_RATE = 16000


# ----------------------------------------------------------------------------
# Small helpers
# ----------------------------------------------------------------------------
def _round_up(a: int, b: int) -> int:
    return ((a + b - 1) // b) * b


def _cdiv(a: int, b: int) -> int:
    return -(-a // b)


def to_mel(hz):
    return 2595.0 * np.log10(1.0 + hz / 700.0)


def to_hz(mel):
    return 700.0 * (10.0 ** (mel / 2595.0) - 1.0)


def get_nfft(kernel_size: int) -> int:
    # scipy.signal.firwin2 convention
    return 2 ** (int(math.ceil(math.log2(kernel_size))) + 1)


def firwin_mesh(kernel_size: int):
    nfft = get_nfft(kernel_size)
    nfreqs = nfft // 2 + 1
    mesh_freq = jnp.linspace(0.0, 1.0, nfreqs, dtype=jnp.float32)
    shift_freq = jnp.exp(
        -1j * jnp.pi * (kernel_size - 1) / 2.0 * mesh_freq.astype(jnp.complex64))
    return mesh_freq, shift_freq


def get_last_window_time_point(kernel_size: int) -> float:
    return 2.0 * math.pi


def logical_switch(x):
    return (x > 0).astype(jnp.float32)


def _vmem_capacity_bytes() -> int:
    """Per-TensorCore VMEM capacity (128 MiB v5e/v6e, 64 MiB v7x)."""
    try:
        cap = int(pltpu.get_tpu_info().vmem_capacity_bytes)
        if cap > 0:
            return cap
    except Exception:
        pass
    return 64 * 1024 * 1024  # conservative default (works on every generation)


# ----------------------------------------------------------------------------
# Pallas conv1d core: stride-1 VALID cross-correlation, groups=1, NCW layout
# ----------------------------------------------------------------------------
def _fir_conv1d_stride1(x, filters, t_out: int, *, t_tile: int,
                        compute_dtype, out_dtype, vmem_budget_bytes):
    """out[b,o,t] = sum_{c,k} filters[o,c,k] * x[b,c,t+k], 0 <= t < t_out."""
    B, C, L = x.shape
    O, C2, K = filters.shape
    assert C2 == C and L >= K and 1 <= t_out <= L - K + 1

    compute_dtype = jnp.dtype(x.dtype if compute_dtype is None else compute_dtype)
    out_dtype = jnp.dtype(x.dtype if out_dtype is None else out_dtype)

    in_item = jnp.dtype(x.dtype).itemsize
    cw_item = compute_dtype.itemsize
    out_item = out_dtype.itemsize

    # Sublane packing of the MXU operand dtype: f32 -> 8, bf16 -> 16, int8/fp8 -> 32.
    packing = max(8, 32 // cw_item)
    kc = packing // math.gcd(C, packing)          # taps per aligned chunk
    CK = C * K

    # Static chunk schedule over taps.  Every chunk except possibly the last has a
    # contraction dim C*kc that is a multiple of `packing`.  No zero-padded taps:
    # OOB garbage only ever multiplies real-tap weights, and such products only
    # feed output columns >= t_out, which are clipped on writeback.
    if K <= kc:
        chunk_sched = [(0, K)]
    else:
        n_full, rem = divmod(K, kc)
        chunk_sched = [(i * kc, kc) for i in range(n_full)]
        if rem:
            b0, t0 = chunk_sched[-1]
            chunk_sched[-1] = (b0, t0 + rem)      # merge remainder (no tiny chunk)
    max_taps = max(t for _, t in chunk_sched)

    hpad = _round_up(max(K - 1, 1), 128)          # lane-aligned right-halo width

    # Lane-dense output time tile: multiple of 128 and of hpad.
    tt = min(int(t_tile), _round_up(t_out, 128))
    tt = _round_up(max(tt, 128), 128)
    tt = _round_up(tt, hpad)

    vmem_cap = _vmem_capacity_bytes()
    if vmem_budget_bytes is None:
        vmem_budget_bytes = int(0.4 * vmem_cap)   # per-TC, generation aware

    def _vmem_estimate(tt_):
        blocks = 2 * C * tt_ * in_item            # input tile (double-buffered)
        blocks += 2 * C * hpad * in_item          # halo (double-buffered)
        blocks += 2 * O * tt_ * out_item          # output tile (at out_dtype!)
        blocks += 2 * O * CK * cw_item            # resident weights
        temps = C * (tt_ + hpad) * (in_item + cw_item)   # slab + compute-dtype cast
        temps += 2 * C * max_taps * tt_ * cw_item        # chunk im2col buffers
        temps += O * tt_ * 4                             # f32 accumulator
        return blocks + temps

    while _vmem_estimate(tt) > vmem_budget_bytes and tt > hpad:
        tt -= hpad                                # stays a multiple of 128 and hpad
    est = _vmem_estimate(tt)
    if est > int(0.95 * vmem_cap):
        raise ValueError(
            f"fir_conv1d: working set ~{est} B exceeds VMEM capacity {vmem_cap} B "
            f"(C*K={CK}, O={O}); split channels or reduce kernel_size.")

    nt = _cdiv(t_out, tt)
    ratio = tt // hpad
    # Last halo block index whose start is still < L.  Clamping only triggers when
    # the halo would start fully past L, in which case no valid output needs it.
    hmax = max((L - 1) // hpad, 0)

    # k-major flat weights: column k*C + c == filters[o, c, k] (matches chunk rows).
    w_km = jnp.transpose(filters, (0, 2, 1)).reshape(O, CK).astype(compute_dtype)

    def kernel(x_ref, h_ref, w_ref, o_ref):
        # x_ref: (C, tt) tile; h_ref: (C, hpad) halo; w_ref: (O, C*K); o_ref: (O, tt)
        slab = jnp.concatenate([x_ref[...], h_ref[...]], axis=-1)   # (C, tt + hpad)
        slab = slab.astype(compute_dtype)        # cast in VMEM (no extra HBM pass)

        def chunk_dot(base, taps):
            if taps == 1:
                rhs = lax.slice(slab, (0, base), (C, base + tt))
            else:
                rhs = jnp.concatenate(
                    [lax.slice(slab, (0, base + r), (C, base + r + tt))
                     for r in range(taps)], axis=0)                 # (taps*C, tt)
            lhs = w_ref[:, base * C:(base + taps) * C]              # (O, taps*C)
            return jnp.dot(lhs, rhs, preferred_element_type=jnp.float32)

        base0, taps0 = chunk_sched[0]
        acc = chunk_dot(base0, taps0)
        for base, taps in chunk_sched[1:]:
            acc = acc + chunk_dot(base, taps)
        o_ref[...] = acc.astype(o_ref.dtype)

    vmem_limit = int(min(vmem_cap, max(int(est * 1.4), 32 * 1024 * 1024)))

    return pl.pallas_call(
        kernel,
        out_shape=jax.ShapeDtypeStruct((B, O, t_out), out_dtype),
        grid=(B, nt),
        in_specs=[
            pl.BlockSpec((None, C, tt), lambda b, t: (b, 0, t)),
            pl.BlockSpec((None, C, hpad),
                         lambda b, t: (b, 0, jnp.minimum((t + 1) * ratio, hmax))),
            pl.BlockSpec((O, CK), lambda b, t: (0, 0)),   # weights stay resident
        ],
        out_specs=pl.BlockSpec((None, O, tt), lambda b, t: (b, 0, t)),
        compiler_params=pltpu.CompilerParams(
            dimension_semantics=("parallel", "parallel"),
            vmem_limit_bytes=vmem_limit,
        ),
    )(x, x, w_km)


def fir_conv1d_pallas(x, filters, stride: int = 1, t_tile: int = 2048,
                      compute_dtype=None, out_dtype=None,
                      vmem_budget_bytes=None):
    """x: (B, C, L); filters: (O, C, K); returns (B, O, T), T=(L-K)//stride+1."""
    B, C, L = x.shape
    O, C2, K = filters.shape
    assert C2 == C and stride >= 1 and L >= K
    T = (L - K) // stride + 1

    if stride == 1:
        return _fir_conv1d_stride1(x, filters, T, t_tile=t_tile,
                                   compute_dtype=compute_dtype, out_dtype=out_dtype,
                                   vmem_budget_bytes=vmem_budget_bytes)

    # stride > 1: polyphase decomposition (decimation folded into channels), so the
    # Pallas kernel only ever issues contiguous lane slices.  pad + phase-split is
    # one fused XLA pre-pass; the inner call produces exactly T columns.
    # TODO(synk): fold the phase split into the kernel (strided lane slices) to
    # remove this one extra HBM pass over the input for stride > 1.
    s = stride
    L_p, K_p = _round_up(L, s), _round_up(K, s)
    x_p = jnp.pad(x, ((0, 0), (0, 0), (0, L_p - L)))
    x_p = x_p.reshape(B, C, L_p // s, s).transpose(0, 1, 3, 2).reshape(B, C * s, L_p // s)
    w_p = jnp.pad(filters, ((0, 0), (0, 0), (0, K_p - K)))
    w_p = w_p.reshape(O, C, K_p // s, s).transpose(0, 1, 3, 2).reshape(O, C * s, K_p // s)
    return _fir_conv1d_stride1(x_p, w_p, T, t_tile=t_tile,
                               compute_dtype=compute_dtype, out_dtype=out_dtype,
                               vmem_budget_bytes=vmem_budget_bytes)


# ----------------------------------------------------------------------------
# FirConvLayer (firwin path, learnable bands + learnable per-channel windows)
# ----------------------------------------------------------------------------
class FirConvLayerPallas:
    def __init__(self, in_channels, out_channels, kernel_size, stride=1,
                 window_k=2, mel_resolution=4, min_low_hz=0.0, min_band_hz=0.0,
                 sample_rate=DEFAULT_SAMPLE_RATE, compute_dtype=None,
                 out_dtype=None, key=None):
        assert in_channels >= 1 and out_channels >= 1 and kernel_size >= 1
        if kernel_size % 2 == 0:
            kernel_size -= 1
        self.in_channels = in_channels
        self.out_channels = out_channels
        self.kernel_size = kernel_size
        self.n_fft = get_nfft(kernel_size)
        self.stride = stride
        self.window_k = window_k
        self.min_low_hz = float(min_low_hz)
        self.min_band_hz = float(min_band_hz)
        self.sample_rate = float(sample_rate)
        self.compute_dtype = compute_dtype
        self.out_dtype = out_dtype

        # set_mel_resolution(min_mel_bins=8)
        max_mel_resolution = int(math.ceil(out_channels / 8))
        self.mel_resolution = min(mel_resolution, max_mel_resolution)

        # _init_bands (filter_init='mel')
        self.lowcut_bands, self.bandwidths = self._mel_init()

        # _init_learnable_windows: window_params ~ U[0,1), repeated over (h, c)
        if key is None:
            key = jax.random.PRNGKey(0)
        wp = jax.random.uniform(key, (window_k,), dtype=jnp.float32)
        self.window_params = jnp.broadcast_to(
            wp, (out_channels, in_channels, window_k)).astype(jnp.float32)
        self.last_window_time_point = get_last_window_time_point(kernel_size)

        # hoisted static window constants
        p = jnp.arange(window_k, dtype=jnp.float32)
        t = jnp.linspace(0.0, self.last_window_time_point, kernel_size,
                         dtype=jnp.float32)
        self._cos_p_pi = jnp.cos(p * jnp.pi)                   # (P,)
        self._cos_time_mesh = jnp.cos(p[:, None] * t[None, :])  # (P, K)

        # _firwin_init_filters
        self.mesh_freq, self.shift_freq = firwin_mesh(kernel_size)

    def _mel_init(self):
        low_bands, bandwidths = np.array([]), np.array([])
        n_filter = self.out_channels // self.mel_resolution
        for i in range(self.mel_resolution):
            ds = 2.0 ** i
            start_low_hz = self.min_low_hz / ds
            delta_hz = self.min_band_hz / ds
            new_sr = self.sample_rate / ds
            end_low_hz = new_sr / 2.0 - (start_low_hz + delta_hz)
            mel = np.linspace(to_mel(start_low_hz), to_mel(end_low_hz), n_filter + 1)
            _low = to_hz(mel) / new_sr
            _bw = np.diff(_low)
            low_bands = np.concatenate([low_bands, _low[:n_filter]])
            bandwidths = np.concatenate([bandwidths, _bw[:n_filter]])
        low = np.repeat(low_bands[:, None], self.in_channels, axis=1)
        bw = np.repeat(bandwidths[:, None], self.in_channels, axis=1)
        return jnp.asarray(low, jnp.float32), jnp.asarray(bw, jnp.float32)

    def _generate_learnable_windows(self):
        # windows[h,c,k] = sum_p wp[h,c,p] * cos(p*pi) * cos(p*t_k)
        return jnp.einsum('hcp,p,pk->hck', self.window_params,
                          self._cos_p_pi, self._cos_time_mesh)

    def _firwin_generate_filters(self):
        windows = self._generate_learnable_windows()                 # (O, C, K)
        m1 = self.mesh_freq[None, None, :] - jnp.abs(self.lowcut_bands)[..., None]
        m2 = m1 - jnp.abs(self.bandwidths)[..., None]
        m1 = logical_switch(m1)
        m2 = 1.0 - logical_switch(m2)
        spec = (m1 * m2).astype(jnp.complex64) * self.shift_freq     # (O, C, M)
        # TODO(synk): irfft / ifftshift have no Pallas primitive; kept as XLA glue.
        filt = jnp.fft.irfft(spec, n=self.n_fft)[..., :self.kernel_size]
        filt = jnp.abs(filt) * windows
        # torch.fft.ifftshift with no dim shifts over ALL dims; the reference
        # module calls it exactly like this, reproduced verbatim.
        filt = jnp.fft.ifftshift(filt)
        return filt.astype(jnp.float32)

    def __call__(self, waveforms):
        filters = self._firwin_generate_filters()
        return fir_conv1d_pallas(waveforms, filters, stride=self.stride,
                                 compute_dtype=self.compute_dtype,
                                 out_dtype=self.out_dtype)


# ----------------------------------------------------------------------------
if __name__ == "__main__":
    key = jax.random.PRNGKey(0)
    k_x, k_w, k_x2, k_w2, k_x3, k_w3 = jax.random.split(key, 6)

    # 1) Module defaults: B=2, C_in=1, L=256, 8 filters of length 33, stride 1.
    B, C_in, L = 2, 1, 256
    C_out, K = 8, 33
    layer = FirConvLayerPallas(in_channels=C_in, out_channels=C_out,
                               kernel_size=K, stride=1, window_k=2, key=k_w)
    x = jax.random.normal(k_x, (B, C_in, L), dtype=jnp.float32)

    fwd = jax.jit(layer.__call__)
    out = jax.block_until_ready(fwd(x))
    T = L - layer.kernel_size + 1
    assert out.shape == (B, C_out, T) and out.dtype == jnp.float32

    filters = layer._firwin_generate_filters()
    ref = lax.conv_general_dilated(
        x, filters, window_strides=(1,), padding='VALID',
        dimension_numbers=('NCH', 'OIH', 'NCH'), precision=lax.Precision.HIGHEST)
    np.testing.assert_allclose(np.asarray(out), np.asarray(ref),
                               rtol=2e-2, atol=2e-2)

    # 2) Multi-tile + halo + T not divisible by the tile (forced small t_tile).
    x3 = jax.random.normal(k_x3, (2, 2, 700), dtype=jnp.float32)
    w3 = 0.1 * jax.random.normal(k_w3, (4, 2, 33), dtype=jnp.float32)
    out3 = jax.block_until_ready(fir_conv1d_pallas(x3, w3, stride=1, t_tile=128))
    ref3 = lax.conv_general_dilated(
        x3, w3, window_strides=(1,), padding='VALID',
        dimension_numbers=('NCH', 'OIH', 'NCH'), precision=lax.Precision.HIGHEST)
    np.testing.assert_allclose(np.asarray(out3), np.asarray(ref3),
                               rtol=2e-2, atol=2e-2)

    # 3) stride > 1 (polyphase path) vs XLA conv.
    x2 = jax.random.normal(k_x2, (2, 2, 300), dtype=jnp.float32)
    w2 = 0.1 * jax.random.normal(k_w2, (4, 2, 17), dtype=jnp.float32)
    out2 = jax.block_until_ready(fir_conv1d_pallas(x2, w2, stride=2))
    ref2 = lax.conv_general_dilated(
        x2, w2, window_strides=(2,), padding='VALID',
        dimension_numbers=('NCH', 'OIH', 'NCH'), precision=lax.Precision.HIGHEST)
    np.testing.assert_allclose(np.asarray(out2), np.asarray(ref2),
                               rtol=2e-2, atol=2e-2)

    # 4) bf16 MXU-operand / bf16-output path (smoke test, f32 accumulation).
    out_bf = jax.block_until_ready(
        fir_conv1d_pallas(x, filters, stride=1,
                          compute_dtype=jnp.bfloat16, out_dtype=jnp.bfloat16))
    assert out_bf.shape == (B, C_out, T) and out_bf.dtype == jnp.bfloat16
    assert bool(jnp.all(jnp.isfinite(out_bf.astype(jnp.float32))))

    print("KERNEL_OK")
</pallas_src>

<mosaic_0001>
module attributes {stable_mosaic.version = 11 : i64} {
  func.func @kernel(%arg0: i32, %arg1: i32, %arg2: memref<1x1x256xf32, #tpu.memory_space<vmem>>, %arg3: memref<1x1x128xf32, #tpu.memory_space<vmem>>, %arg4: memref<8x33xf32, #tpu.memory_space<vmem>>, %arg5: memref<1x8x256xf32, #tpu.memory_space<vmem>>) attributes {dimension_semantics = [#tpu.dimension_semantics<parallel>, #tpu.dimension_semantics<parallel>], iteration_bounds = array<i64: 2, 1>, scalar_prefetch = 0 : i64, scratch_operands = 0 : i64, tpu.core_type = #tpu.core_type<tc>, window_params = [{transform_indices = @transform_0, window_bounds = array<i64: 1, 1, 256>}, {transform_indices = @transform_1, window_bounds = array<i64: 1, 1, 128>}, {pipeline_mode = #tpu.pipeline_mode<synchronous>, transform_indices = @transform_2, window_bounds = array<i64: 8, 33>}, {transform_indices = @transform_3, window_bounds = array<i64: 1, 8, 256>}]} {
    %c0 = arith.constant 0 : index
    %c0_0 = arith.constant 0 : index
    %c0_1 = arith.constant 0 : index
    %0 = vector.load %arg2[%c0, %c0_0, %c0_1] : memref<1x1x256xf32, #tpu.memory_space<vmem>>, vector<1x1x256xf32>
    %1 = vector.shape_cast %0 : vector<1x1x256xf32> to vector<1x256xf32>
    %c0_2 = arith.constant 0 : index
    %c0_3 = arith.constant 0 : index
    %c0_4 = arith.constant 0 : index
    %2 = vector.load %arg3[%c0_2, %c0_3, %c0_4] : memref<1x1x128xf32, #tpu.memory_space<vmem>>, vector<1x1x128xf32>
    %3 = vector.shape_cast %2 : vector<1x1x128xf32> to vector<1x128xf32>
    %4 = tpu.concatenate %1, %3 in 1 : vector<1x256xf32>, vector<1x128xf32> -> vector<1x384xf32>
    %5 = vector.extract_strided_slice %4 {offsets = [0, 0], sizes = [1, 256], strides = [1, 1]} : vector<1x384xf32> to vector<1x256xf32>
    %6 = vector.extract_strided_slice %4 {offsets = [0, 1], sizes = [1, 256], strides = [1, 1]} : vector<1x384xf32> to vector<1x256xf32>
    %7 = vector.extract_strided_slice %4 {offsets = [0, 2], sizes = [1, 256], strides = [1, 1]} : vector<1x384xf32> to vector<1x256xf32>
    %8 = vector.extract_strided_slice %4 {offsets = [0, 3], sizes = [1, 256], strides = [1, 1]} : vector<1x384xf32> to vector<1x256xf32>
    %9 = vector.extract_strided_slice %4 {offsets = [0, 4], sizes = [1, 256], strides = [1, 1]} : vector<1x384xf32> to vector<1x256xf32>
    %10 = vector.extract_strided_slice %4 {offsets = [0, 5], sizes = [1, 256], strides = [1, 1]} : vector<1x384xf32> to vector<1x256xf32>
    %11 = vector.extract_strided_slice %4 {offsets = [0, 6], sizes = [1, 256], strides = [1, 1]} : vector<1x384xf32> to vector<1x256xf32>
    %12 = vector.extract_strided_slice %4 {offsets = [0, 7], sizes = [1, 256], strides = [1, 1]} : vector<1x384xf32> to vector<1x256xf32>
    %13 = tpu.concatenate %5, %6, %7, %8, %9, %10, %11, %12 in 0 : vector<1x256xf32>, vector<1x256xf32>, vector<1x256xf32>, vector<1x256xf32>, vector<1x256xf32>, vector<1x256xf32>, vector<1x256xf32>, vector<1x256xf32> -> vector<8x256xf32>
    %c0_5 = arith.constant 0 : index
    %c0_6 = arith.constant 0 : index
    %14 = vector.load %arg4[%c0_5, %c0_6] : memref<8x33xf32, #tpu.memory_space<vmem>>, vector<8x8xf32>
    %cst = arith.constant dense<0.000000e+00> : vector<8x256xf32>
    %15 = tpu.matmul %14, %13, %cst {dimension_numbers = #tpu.dot_dimension_numbers<[1], [0], [0], [1], [0, 0, 1, 1], [], []>} : vector<8x8xf32>, vector<8x256xf32>, vector<8x256xf32> -> vector<8x256xf32>
    %16 = vector.extract_strided_slice %4 {offsets = [0, 8], sizes = [1, 256], strides = [1, 1]} : vector<1x384xf32> to vector<1x256xf32>
    %17 = vector.extract_strided_slice %4 {offsets = [0, 9], sizes = [1, 256], strides = [1, 1]} : vector<1x384xf32> to vector<1x256xf32>
    %18 = vector.extract_strided_slice %4 {offsets = [0, 10], sizes = [1, 256], strides = [1, 1]} : vector<1x384xf32> to vector<1x256xf32>
    %19 = vector.extract_strided_slice %4 {offsets = [0, 11], sizes = [1, 256], strides = [1, 1]} : vector<1x384xf32> to vector<1x256xf32>
    %20 = vector.extract_strided_slice %4 {offsets = [0, 12], sizes = [1, 256], strides = [1, 1]} : vector<1x384xf32> to vector<1x256xf32>
    %21 = vector.extract_strided_slice %4 {offsets = [0, 13], sizes = [1, 256], strides = [1, 1]} : vector<1x384xf32> to vector<1x256xf32>
    %22 = vector.extract_strided_slice %4 {offsets = [0, 14], sizes = [1, 256], strides = [1, 1]} : vector<1x384xf32> to vector<1x256xf32>
    %23 = vector.extract_strided_slice %4 {offsets = [0, 15], sizes = [1, 256], strides = [1, 1]} : vector<1x384xf32> to vector<1x256xf32>
    %24 = tpu.concatenate %16, %17, %18, %19, %20, %21, %22, %23 in 0 : vector<1x256xf32>, vector<1x256xf32>, vector<1x256xf32>, vector<1x256xf32>, vector<1x256xf32>, vector<1x256xf32>, vector<1x256xf32>, vector<1x256xf32> -> vector<8x256xf32>
    %c0_7 = arith.constant 0 : index
    %c8 = arith.constant 8 : index
    %25 = vector.load %arg4[%c0_7, %c8] : memref<8x33xf32, #tpu.memory_space<vmem>>, vector<8x8xf32>
    %cst_8 = arith.constant dense<0.000000e+00> : vector<8x256xf32>
    %26 = tpu.matmul %25, %24, %cst_8 {dimension_numbers = #tpu.dot_dimension_numbers<[1], [0], [0], [1], [0, 0, 1, 1], [], []>} : vector<8x8xf32>, vector<8x256xf32>, vector<8x256xf32> -> vector<8x256xf32>
    %27 = arith.addf %15, %26 : vector<8x256xf32>
    %28 = vector.extract_strided_slice %4 {offsets = [0, 16], sizes = [1, 256], strides = [1, 1]} : vector<1x384xf32> to vector<1x256xf32>
    %29 = vector.extract_strided_slice %4 {offsets = [0, 17], sizes = [1, 256], strides = [1, 1]} : vector<1x384xf32> to vector<1x256xf32>
    %30 = vector.extract_strided_slice %4 {offsets = [0, 18], sizes = [1, 256], strides = [1, 1]} : vector<1x384xf32> to vector<1x256xf32>
    %31 = vector.extract_strided_slice %4 {offsets = [0, 19], sizes = [1, 256], strides = [1, 1]} : vector<1x384xf32> to vector<1x256xf32>
    %32 = vector.extract_strided_slice %4 {offsets = [0, 20], sizes = [1, 256], strides = [1, 1]} : vector<1x384xf32> to vector<1x256xf32>
    %33 = vector.extract_strided_slice %4 {offsets = [0, 21], sizes = [1, 256], strides = [1, 1]} : vector<1x384xf32> to vector<1x256xf32>
    %34 = vector.extract_strided_slice %4 {offsets = [0, 22], sizes = [1, 256], strides = [1, 1]} : vector<1x384xf32> to vector<1x256xf32>
    %35 = vector.extract_strided_slice %4 {offsets = [0, 23], sizes = [1, 256], strides = [1, 1]} : vector<1x384xf32> to vector<1x256xf32>
    %36 = tpu.concatenate %28, %29, %30, %31, %32, %33, %34, %35 in 0 : vector<1x256xf32>, vector<1x256xf32>, vector<1x256xf32>, vector<1x256xf32>, vector<1x256xf32>, vector<1x256xf32>, vector<1x256xf32>, vector<1x256xf32> -> vector<8x256xf32>
    %c0_9 = arith.constant 0 : index
    %c16 = arith.constant 16 : index
    %37 = vector.load %arg4[%c0_9, %c16] : memref<8x33xf32, #tpu.memory_space<vmem>>, vector<8x8xf32>
    %cst_10 = arith.constant dense<0.000000e+00> : vector<8x256xf32>
    %38 = tpu.matmul %37, %36, %cst_10 {dimension_numbers = #tpu.dot_dimension_numbers<[1], [0], [0], [1], [0, 0, 1, 1], [], []>} : vector<8x8xf32>, vector<8x256xf32>, vector<8x256xf32> -> vector<8x256xf32>
    %39 = arith.addf %27, %38 : vector<8x256xf32>
    %40 = vector.extract_strided_slice %4 {offsets = [0, 24], sizes = [1, 256], strides = [1, 1]} : vector<1x384xf32> to vector<1x256xf32>
    %41 = vector.extract_strided_slice %4 {offsets = [0, 25], sizes = [1, 256], strides = [1, 1]} : vector<1x384xf32> to vector<1x256xf32>
    %42 = vector.extract_strided_slice %4 {offsets = [0, 26], sizes = [1, 256], strides = [1, 1]} : vector<1x384xf32> to vector<1x256xf32>
    %43 = vector.extract_strided_slice %4 {offsets = [0, 27], sizes = [1, 256], strides = [1, 1]} : vector<1x384xf32> to vector<1x256xf32>
    %44 = vector.extract_strided_slice %4 {offsets = [0, 28], sizes = [1, 256], strides = [1, 1]} : vector<1x384xf32> to vector<1x256xf32>
    %45 = vector.extract_strided_slice %4 {offsets = [0, 29], sizes = [1, 256], strides = [1, 1]} : vector<1x384xf32> to vector<1x256xf32>
    %46 = vector.extract_strided_slice %4 {offsets = [0, 30], sizes = [1, 256], strides = [1, 1]} : vector<1x384xf32> to vector<1x256xf32>
    %47 = vector.extract_strided_slice %4 {offsets = [0, 31], sizes = [1, 256], strides = [1, 1]} : vector<1x384xf32> to vector<1x256xf32>
    %48 = vector.extract_strided_slice %4 {offsets = [0, 32], sizes = [1, 256], strides = [1, 1]} : vector<1x384xf32> to vector<1x256xf32>
    %49 = tpu.concatenate %40, %41, %42, %43, %44, %45, %46, %47, %48 in 0 : vector<1x256xf32>, vector<1x256xf32>, vector<1x256xf32>, vector<1x256xf32>, vector<1x256xf32>, vector<1x256xf32>, vector<1x256xf32>, vector<1x256xf32>, vector<1x256xf32> -> vector<9x256xf32>
    %c0_11 = arith.constant 0 : index
    %c24 = arith.constant 24 : index
    %50 = vector.load %arg4[%c0_11, %c24] : memref<8x33xf32, #tpu.memory_space<vmem>>, vector<8x9xf32>
    %cst_12 = arith.constant dense<0.000000e+00> : vector<8x256xf32>
    %51 = tpu.matmul %50, %49, %cst_12 {dimension_numbers = #tpu.dot_dimension_numbers<[1], [0], [0], [1], [0, 0, 1, 1], [], []>} : vector<8x9xf32>, vector<9x256xf32>, vector<8x256xf32> -> vector<8x256xf32>
    %52 = arith.addf %39, %51 : vector<8x256xf32>
    %c0_13 = arith.constant 0 : index
    %c0_14 = arith.constant 0 : index
    %c0_15 = arith.constant 0 : index
    %53 = vector.load %arg5[%c0_13, %c0_14, %c0_15] : memref<1x8x256xf32, #tpu.memory_space<vmem>>, vector<1x8x256xf32>
    %54 = vector.shape_cast %53 : vector<1x8x256xf32> to vector<8x256xf32>
    %55 = vector.shape_cast %52 : vector<8x256xf32> to vector<1x8x256xf32>
    tpu.vector_store %arg5[%c0_13, %c0_14, %c0_15], %55 {strides = array<i32>} : memref<1x8x256xf32, #tpu.memory_space<vmem>>, vector<1x8x256xf32>,
    return
  }
  func.func @transform_0(%arg0: i32, %arg1: i32) -> (i32, i32, i32) {
    %c0_i32 = arith.constant 0 : i32
    %c0_i32_0 = arith.constant 0 : i32
    return %arg0, %c0_i32, %arg1 : i32, i32, i32
  }
  func.func @transform_1(%arg0: i32, %arg1: i32) -> (i32, i32, i32) {
    %c1_i32 = arith.constant 1 : i32
    %0 = arith.addi %arg1, %c1_i32 : i32
    %c2_i32 = arith.constant 2 : i32
    %1 = arith.muli %0, %c2_i32 : i32
    %c1_i32_0 = arith.constant 1 : i32
    %2 = arith.minsi %1, %c1_i32_0 : i32
    %c0_i32 = arith.constant 0 : i32
    %c0_i32_1 = arith.constant 0 : i32
    return %arg0, %c0_i32, %2 : i32, i32, i32
  }
  func.func @transform_2(%arg0: i32, %arg1: i32) -> (i32, i32) {
    %c0_i32 = arith.constant 0 : i32
    %c0_i32_0 = arith.constant 0 : i32
    %c0_i32_1 = arith.constant 0 : i32
    return %c0_i32, %c0_i32_0 : i32, i32
  }
  func.func @transform_3(%arg0: i32, %arg1: i32) -> (i32, i32, i32) {
    %c0_i32 = arith.constant 0 : i32
    %c0_i32_0 = arith.constant 0 : i32
    return %arg0, %c0_i32, %arg1 : i32, i32, i32
  }
}

</mosaic_0001>

<llo_original>
// kernel: reverse.0
$region0: #{reverse.0}
  %s0 = inlined_call_operand.vmem [shape: f32[8,1,63], index: 0, kind: input, shape index: {}]
  %s1 = inlined_call_operand.vmem [shape: f32[8,1,63], index: 1, kind: output, shape index: {}]
  %v2 = vlaneseq
  %v3 = vsub.s32 62, %v2
  %4 = vset.pattern.permute.xlu0 %v3
  $region1: #{reverse.0} parent=0
    #allocation0 [shape = 'u8[4096]{0}', space=vmem, size = 0x1000, scoped, tag = 'operand span for operand 0']
    #allocation1 [shape = 'u8[4096]{0}', space=vmem, size = 0x1000, scoped, tag = 'operand span for operand 1']
    // Predicated region
    $region2: #{reverse.0} parent=1 // pred_check
      _
    $region3: #{reverse.0} parent=1 // pred_check_branch
      %6 = sbr.rel (0) target = $region5
    $region4: #{reverse.0} parent=1 // pred_region
      // Predicated region
      $region6: #{reverse.0} parent=4 // pred_check
        _
      $region7: #{reverse.0} parent=4 // pred_check_branch
        %8 = sbr.rel (0) target = $region9
      $region8: #{reverse.0} parent=4 // pred_region
        // Predicated region
        $region21: #{reverse.0} parent=8 // pred_check
          _
        $region22: #{reverse.0} parent=8 // pred_check_branch
          %24 = sbr.rel (0) target = $region24
        $region23: #{reverse.0} parent=8 // pred_region
          loop: start=0, step=1, limit=1
          $region25: #{reverse.0} parent=23 // loop_pre_header
            _
          $region26: #{reverse.0} parent=23 // loop_header
            %s26 = sphi 0, %s30
            %p27 = scmp.ge.s32.totalorder %s26, 1
            %s31 = sphi %s0, %s0
            %s32 = sphi [#allocation0], [#allocation0]
          $region27: #{reverse.0} parent=23 // loop_header_branch
            %29 = sbr.rel (%p27) target = $region31
          $region28: #{reverse.0} parent=23 // loop_body
            %v33 = vld [vmem:[%s31] sm:$0xff]
            %34 = vst [vmem:[%s32] sm:$0xff] %v33
          $region29: #{reverse.0} parent=23 // loop_footer
            %s30 = sadd.s32 1, %s26
          $region30: #{reverse.0} parent=23 // loop_footer_branch
            %25 = sbr.rel target = $region26
          $region31: #{reverse.0} parent=23 // loop_exit
            _
        $region24: #{reverse.0} parent=8 // pred_fallthru
          _
        // Predicated region
        $region32: #{reverse.0} parent=8 // pred_check
          _
        $region33: #{reverse.0} parent=8 // pred_check_branch
          %36 = sbr.rel target = $region35
        $region34: #{reverse.0} parent=8 // pred_region
          _
        $region35: #{reverse.0} parent=8 // pred_fallthru
          _
      $region9: #{reverse.0} parent=4 // pred_fallthru
        _
      // Predicated region
      $region10: #{reverse.0} parent=4 // pred_check
        _
      $region11: #{reverse.0} parent=4 // pred_check_branch
        %10 = sbr.rel target = $region13
      $region12: #{reverse.0} parent=4 // pred_region
        %s12 = ssub.s32 256, 1
        loop: start=0, step=1, limit=1
        $region14: #{reverse.0} parent=12 // loop_pre_header
          _
        $region15: #{reverse.0} parent=12 // loop_header
          %s14 = sphi 0, %s18
          %p15 = scmp.ge.s32.totalorder %s14, 1
          %s19 = sphi %s0, %s0
          %s20 = sphi [#allocation0], [#allocation0]
        $region16: #{reverse.0} parent=12 // loop_header_branch
          %17 = sbr.rel (%p15) target = $region20
        $region17: #{reverse.0} parent=12 // loop_body
          %v21 = vld [vmem:[%s19] sm:%s12]
          %22 = vst [vmem:[%s20] sm:%s12] %v21
        $region18: #{reverse.0} parent=12 // loop_footer
          %s18 = sadd.s32 1, %s14
        $region19: #{reverse.0} parent=12 // loop_footer_branch
          %13 = sbr.rel target = $region15
        $region20: #{reverse.0} parent=12 // loop_exit
          _
      $region13: #{reverse.0} parent=4 // pred_fallthru
        _
    $region5: #{reverse.0} parent=1 // pred_fallthru
      _
    %37 = vnop
    %v38 = vld [vmem:[#allocation0] sm:$0xff]
    %39 = vperm.xlu0 %4, %v38
    %v40 = vpop.permute.xlu0 %39
    %41 = vst [vmem:[#allocation1] sm:$0xff] %v40
    // Predicated region
    $region36: #{reverse.0} parent=1 // pred_check
      _
    $region37: #{reverse.0} parent=1 // pred_check_branch
      %43 = sbr.rel (0) target = $region39
    $region38: #{reverse.0} parent=1 // pred_region
      // Predicated region
      $region40: #{reverse.0} parent=38 // pred_check
        _
      $region41: #{reverse.0} parent=38 // pred_check_branch
        %45 = sbr.rel (0) target = $region43
      $region42: #{reverse.0} parent=38 // pred_region
        // Predicated region
        $region55: #{reverse.0} parent=42 // pred_check
          _
        $region56: #{reverse.0} parent=42 // pred_check_branch
          %61 = sbr.rel (0) target = $region58
        $region57: #{reverse.0} parent=42 // pred_region
          loop: start=0, step=1, limit=1
          $region59: #{reverse.0} parent=57 // loop_pre_header
            _
          $region60: #{reverse.0} parent=57 // loop_header
            %s63 = sphi 0, %s67
            %p64 = scmp.ge.s32.totalorder %s63, 1
            %s68 = sphi [#allocation1], [#allocation1]
            %s69 = sphi %s1, %s1
          $region61: #{reverse.0} parent=57 // loop_header_branch
            %66 = sbr.rel (%p64) target = $region65
          $region62: #{reverse.0} parent=57 // loop_body
            %v70 = vld [vmem:[%s68] sm:$0xff]
            %71 = vst [vmem:[%s69] sm:$0xff] %v70
          $region63: #{reverse.0} parent=57 // loop_footer
            %s67 = sadd.s32 1, %s63
          $region64: #{reverse.0} parent=57 // loop_footer_branch
            %62 = sbr.rel target = $region60
          $region65: #{reverse.0} parent=57 // loop_exit
            _
        $region58: #{reverse.0} parent=42 // pred_fallthru
          _
        // Predicated region
        $region66: #{reverse.0} parent=42 // pred_check
          _
        $region67: #{reverse.0} parent=42 // pred_check_branch
          %73 = sbr.rel target = $region69
        $region68: #{reverse.0} parent=42 // pred_region
          _
        $region69: #{reverse.0} parent=42 // pred_fallthru
          _
      $region43: #{reverse.0} parent=38 // pred_fallthru
        _
      // Predicated region
      $region44: #{reverse.0} parent=38 // pred_check
        _
      $region45: #{reverse.0} parent=38 // pred_check_branch
        %47 = sbr.rel target = $region47
      $region46: #{reverse.0} parent=38 // pred_region
        %s49 = ssub.s32 256, 1
        loop: start=0, step=1, limit=1
        $region48: #{reverse.0} parent=46 // loop_pre_header
          _
        $region49: #{reverse.0} parent=46 // loop_header
          %s51 = sphi 0, %s55
          %p52 = scmp.ge.s32.totalorder %s51, 1
          %s56 = sphi [#allocation1], [#allocation1]
          %s57 = sphi %s1, %s1
        $region50: #{reverse.0} parent=46 // loop_header_branch
          %54 = sbr.rel (%p52) target = $region54
        $region51: #{reverse.0} parent=46 // loop_body
          %v58 = vld [vmem:[%s56] sm:%s49]
          %59 = vst [vmem:[%s57] sm:%s49] %v58
        $region52: #{reverse.0} parent=46 // loop_footer
          %s55 = sadd.s32 1, %s51
        $region53: #{reverse.0} parent=46 // loop_footer_branch
          %50 = sbr.rel target = $region49
        $region54: #{reverse.0} parent=46 // loop_exit
          _
      $region47: #{reverse.0} parent=38 // pred_fallthru
        _
    $region39: #{reverse.0} parent=1 // pred_fallthru
      _
    %74 = vnop

// kernel: a_call__.1
$region0: #{a_call__.1}
  #allocation0 [shape = 'u32[]', space=smem, size = 0x4, offset = 0x4, fixed_abs, tag = 'smem constant byte address 0x4 - core index']
  #allocation1 [shape = 'u32[72,128]{1,0:T(1,128)}', space=vmem, size = 0x9000, scoped, tag = 'internal scratch']
  %s0 = inlined_call_operand.vmem [shape: f32[2,1,256], index: 0, kind: input, shape index: {}, may-alias: {0,1}]
  %s1 = inlined_call_operand.vmem [shape: f32[2,1,256], index: 1, kind: input, shape index: {}, may-alias: {0,1}]
  %s2 = inlined_call_operand.vmem [shape: f32[8,33], index: 2, kind: input, shape index: {}]
  %s3 = inlined_call_operand.hbm [shape: f32[2,8,224], index: 3, kind: output, shape index: {}]
  %s4 = sld [smem:[#allocation0]]
  $region45: #{a_call__.1} parent=0
    _
  %s6 = ssub.s32 1, %s4
  %s7 = scalar_select 0, %s6, %s4
  $region1: #{a_call__.1} parent=0
    #allocation2 [shape = 'u8[16384]{0}', space=vmem, size = 0x4000, scoped, tag = 'output window, operand 0']
    #allocation3 [shape = 's32[2]{0}', space=sflag, size = 0x8, scoped, tag = 'scoped memory for a_call__.1']
    %8 = vsyncpa [#allocation3], 0
    %s9 = scalar_lea.sflag [#allocation3], 1
    %10 = vsyncpa %s9, 0
    loop: start=0, step=1, limit=4
    $region2: #{a_call__.1} parent=1 // loop_pre_header
      _
    $region3: #{a_call__.1} parent=1 // loop_header
      %s12 = sphi 0, %s16
      %p13 = scmp.ge.s32.totalorder %s12, 4
      %s19 = sphi 0, %s31
      %s20 = sphi 0, %s27
      %s21 = sphi 0, %s19
      %s22 = sphi 0, %s20
      %s23 = sphi 0, %s21
      %s24 = sphi 0, %s22
      %s36 = sphi 0, %s38
      %s39 = sphi 0, %s36
      %s40 = sphi 0, %s39
      %s56 = sphi 0, %s40
      %s72 = sphi 0, %s74
      %s75 = sphi 0, %s72
      %s76 = sphi 0, %s75
      %s92 = sphi 0, %s76
      %s96 = sphi 0, %s96
      %s98 = sphi 0, %s96
      %s99 = sphi 0, %s98
      %s113 = sphi 0, %s99
      %s121 = sphi 0, %s123
      %s124 = sphi 0, %s121
      %s125 = sphi 0, %s124
      %s141 = sphi 0, %s125
    $region4: #{a_call__.1} parent=1 // loop_header_branch
      %15 = sbr.rel (%p13) target = $region8
    $region5: #{a_call__.1} parent=1 // loop_body
      %s17 = ssub.s32 %s12, 1
      %s18 = ssub.s32 %s12, 2
      %s25 = sadd.s32 1, %s20
      %p26 = scmp.ge.s32.totalorder %s25, 1
      %s27 = scalar_select %p26, 0, %s25
      %s28 = sadd.s32 1, %s19
      %s29 = scalar_select %p26, %s28, %s19
      %p30 = scmp.ge.s32.totalorder %s29, 2
      %s31 = scalar_select %p30, 0, %s29
      %s32 = ssub.s32 %s19, %s31
      %s33 = ssub.s32 %s20, %s27
      %s34 = sor.u32 %s32, %s33
      %p35 = scmp.eq.s32.totalorder %s34, 0
      %s37 = sadd.s32 %s36, 1
      %s38 = scalar_select %p35, %s36, %s37
      %p41 = pneg %p35
      %p42 = scmp.eq.s32.totalorder %s12, 1
      %p43 = por %p41, %p42
      %p44 = scmp.ne.s32.totalorder %s36, %s39
      %p45 = scmp.eq.s32.totalorder %s12, 0
      %p46 = por %p44, %p45
      %p47 = scmp.ne.s32.totalorder %s36, %s39
      %p48 = scmp.eq.s32.totalorder %s17, 1
      %p49 = por %p47, %p48
      %p50 = scmp.ne.s32.totalorder %s39, %s40
      %p51 = scmp.eq.s32.totalorder %s17, 0
      %p52 = por %p50, %p51
      %p53 = scmp.ne.s32.totalorder %s39, %s40
      %p54 = scmp.eq.s32.totalorder %s18, 1
      %p55 = por %p53, %p54
      %p57 = scmp.ne.s32.totalorder %s40, %s56
      %p58 = scmp.eq.s32.totalorder %s18, 0
      %p59 = por %p57, %p58
      %s60 = sadd.s32 %s20, 1
      %s61 = smul.u32 %s60, 2
      %p62 = scmp.lt.s32.totalorder %s61, 1
      %s63 = scalar_select %p62, %s61, 1
      %s64 = sadd.s32 %s27, 1
      %s65 = smul.u32 %s64, 2
      %p66 = scmp.lt.s32.totalorder %s65, 1
      %s67 = scalar_select %p66, %s65, 1
      %s68 = ssub.s32 %s19, %s31
      %s69 = ssub.s32 %s63, %s67
      %s70 = sor.u32 %s68, %s69
      %p71 = scmp.eq.s32.totalorder %s70, 0
      %s73 = sadd.s32 %s72, 1
      %s74 = scalar_select %p71, %s72, %s73
      %p77 = pneg %p71
      %p78 = scmp.eq.s32.totalorder %s12, 1
      %p79 = por %p77, %p78
      %p80 = scmp.ne.s32.totalorder %s72, %s75
      %p81 = scmp.eq.s32.totalorder %s12, 0
      %p82 = por %p80, %p81
      %p83 = scmp.ne.s32.totalorder %s72, %s75
      %p84 = scmp.eq.s32.totalorder %s17, 1
      %p85 = por %p83, %p84
      %p86 = scmp.ne.s32.totalorder %s75, %s76
      %p87 = scmp.eq.s32.totalorder %s17, 0
      %p88 = por %p86, %p87
      %p89 = scmp.ne.s32.totalorder %s75, %s76
      %p90 = scmp.eq.s32.totalorder %s18, 1
      %p91 = por %p89, %p90
      %p93 = scmp.ne.s32.totalorder %s76, %s92
      %p94 = scmp.eq.s32.totalorder %s18, 0
      %p95 = por %p93, %p94
      %s97 = sadd.s32 %s96, 1
      %p100 = scmp.eq.s32.totalorder %s12, 1
      %p101 = scmp.ne.s32.totalorder %s96, %s98
      %p102 = scmp.eq.s32.totalorder %s12, 0
      %p103 = por %p101, %p102
      %p104 = scmp.ne.s32.totalorder %s96, %s98
      %p105 = scmp.eq.s32.totalorder %s17, 1
      %p106 = por %p104, %p105
      %p107 = scmp.ne.s32.totalorder %s98, %s99
      %p108 = scmp.eq.s32.totalorder %s17, 0
      %p109 = por %p107, %p108
      %p110 = scmp.ne.s32.totalorder %s98, %s99
      %p111 = scmp.eq.s32.totalorder %s18, 1
      %p112 = por %p110, %p111
      %p114 = scmp.ne.s32.totalorder %s99, %s113
      %p115 = scmp.eq.s32.totalorder %s18, 0
      %p116 = por %p114, %p115
      %s117 = ssub.s32 %s19, %s31
      %s118 = ssub.s32 %s20, %s27
      %s119 = sor.u32 %s117, %s118
      %p120 = scmp.eq.s32.totalorder %s119, 0
      %s122 = sadd.s32 %s121, 1
      %s123 = scalar_select %p120, %s121, %s122
      %p126 = pneg %p120
      %p127 = scmp.eq.s32.totalorder %s12, 1
      %p128 = por %p126, %p127
      %p129 = scmp.ne.s32.totalorder %s121, %s124
      %p130 = scmp.eq.s32.totalorder %s12, 0
      %p131 = por %p129, %p130
      %p132 = scmp.ne.s32.totalorder %s121, %s124
      %p133 = scmp.eq.s32.totalorder %s17, 1
      %p134 = por %p132, %p133
      %p135 = scmp.ne.s32.totalorder %s124, %s125
      %p136 = scmp.eq.s32.totalorder %s17, 0
      %p137 = por %p135, %p136
      %p138 = scmp.ne.s32.totalorder %s124, %s125
      %p139 = scmp.eq.s32.totalorder %s18, 1
      %p140 = por %p138, %p139
      %p142 = scmp.ne.s32.totalorder %s125, %s141
      %p143 = scmp.eq.s32.totalorder %s18, 0
      %p144 = por %p142, %p143
      %p145 = scmp.le.s32.totalorder 1, %s12
      %p146 = scmp.lt.s32.totalorder %s12, 3
      %p147 = pnand %p145, %p146
      %p148 = pneg %p147
      // Predicated region
      $region9: #{a_call__.1} parent=5 // pred_check
        _
      $region10: #{a_call__.1} parent=5 // pred_check_branch
        %150 = sbr.rel (%p147) target = $region12
      $region11: #{a_call__.1} parent=5 // pred_region
        %s151 = ssub.s32 %s12, 1
        // Predicated region
        $region13: #{a_call__.1} parent=11 // pred_check
          %p152 = pneg %p109
        $region14: #{a_call__.1} parent=11 // pred_check_branch
          %154 = sbr.rel (%p152) target = $region16
        $region15: #{a_call__.1} parent=11 // pred_region
          _
        $region16: #{a_call__.1} parent=11 // pred_fallthru
          _
      $region12: #{a_call__.1} parent=5 // pred_fallthru
        _
      %p155 = scmp.lt.s32.totalorder %s12, 2
      // Predicated region
      $region17: #{a_call__.1} parent=5 // pred_check
        %p156 = pneg %p155
      $region18: #{a_call__.1} parent=5 // pred_check_branch
        %158 = sbr.rel (%p156) target = $region20
      $region19: #{a_call__.1} parent=5 // pred_region
        // Predicated region
        $region21: #{a_call__.1} parent=19 // pred_check
          %p159 = pneg %p46
        $region22: #{a_call__.1} parent=19 // pred_check_branch
          %161 = sbr.rel (%p159) target = $region24
        $region23: #{a_call__.1} parent=19 // pred_region
          %s162 = smul.u32 2, %s20
          %p163 = scmp.lt.s32.totalorder %s19, 1
          %s164 = scalar_select %p163, %s19, 1
          %p165 = scmp.lt.s32.totalorder %s162, 1
          %s166 = scalar_select %p165, %s162, 1
          %s167 = smul.addr %s164, 2
          %s168 = sadd.s32 %s166, %s167
          %s169 = scalar_lea.vmem %s0, %s168
          %s170 = smul.u32 2, %s20
        $region24: #{a_call__.1} parent=19 // pred_fallthru
          _
        // Predicated region
        $region25: #{a_call__.1} parent=19 // pred_check
          %p171 = pneg %p82
        $region26: #{a_call__.1} parent=19 // pred_check_branch
          %173 = sbr.rel (%p171) target = $region28
        $region27: #{a_call__.1} parent=19 // pred_region
          %s174 = sadd.s32 %s20, 1
          %s175 = smul.u32 %s174, 2
          %p176 = scmp.lt.s32.totalorder %s175, 1
          %s177 = scalar_select %p176, %s175, 1
          %p178 = scmp.lt.s32.totalorder %s19, 1
          %s179 = scalar_select %p178, %s19, 1
          %p180 = scmp.lt.s32.totalorder %s177, 1
          %s181 = scalar_select %p180, %s177, 1
          %s182 = smul.addr %s179, 2
          %s183 = sadd.s32 %s181, %s182
          %s184 = scalar_lea.vmem %s1, %s183
          %s185 = sadd.s32 %s20, 1
          %s186 = smul.u32 %s185, 2
          %p187 = scmp.lt.s32.totalorder %s186, 1
          %s188 = scalar_select %p187, %s186, 1
        $region28: #{a_call__.1} parent=19 // pred_fallthru
          _
      $region20: #{a_call__.1} parent=5 // pred_fallthru
        _
      %p189 = scmp.le.s32.totalorder 1, %s12
      %p190 = scmp.lt.s32.totalorder %s12, 3
      %p191 = pnand %p189, %p190
      %p192 = pneg %p191
      // Predicated region
      $region29: #{a_call__.1} parent=5 // pred_check
        _
      $region30: #{a_call__.1} parent=5 // pred_check_branch
        %194 = sbr.rel (%p191) target = $region32
      $region31: #{a_call__.1} parent=5 // pred_region
        %s195 = ssub.s32 %s12, 1
        %s196 = smul.u32 2, %s22
        %p197 = scmp.lt.s32.totalorder %s21, 1
        %s198 = scalar_select %p197, %s21, 1
        %p199 = scmp.lt.s32.totalorder %s196, 1
        %s200 = scalar_select %p199, %s196, 1
        %s201 = smul.addr %s198, 2
        %s202 = sadd.s32 %s200, %s201
        %s203 = scalar_lea.vmem %s0, %s202
        %p204 = pneg %p52
        %p205 = pneg %p49
        %s206 = sadd.s32 %s22, 1
        %s207 = smul.u32 %s206, 2
        %p208 = scmp.lt.s32.totalorder %s207, 1
        %s209 = scalar_select %p208, %s207, 1
        %p210 = scmp.lt.s32.totalorder %s21, 1
        %s211 = scalar_select %p210, %s21, 1
        %p212 = scmp.lt.s32.totalorder %s209, 1
        %s213 = scalar_select %p212, %s209, 1
        %s214 = smul.addr %s211, 2
        %s215 = sadd.s32 %s213, %s214
        %s216 = scalar_lea.vmem %s1, %s215
        %p217 = pneg %p88
        %p218 = pneg %p85
        %p219 = pneg %p109
        %p220 = pneg %p106
        %p221 = pneg %p137
        %p222 = pneg %p134
        %s223 = sand.u32 %s124, 1
        %s224 = scalar_lea.sflag [#allocation3], %s223
        %s225 = sand.u32 %s124, 1
        %s226 = smul.addr %s225, 16
        %s227 = scalar_lea.vmem [#allocation2], %s226
        %s228 = smul.u32 2, %s22
        %p229 = scmp.lt.s32.totalorder %s21, 1
        %s230 = scalar_select %p229, %s21, 1
        %p231 = scmp.lt.s32.totalorder %s228, 1
        %s232 = scalar_select %p231, %s228, 1
        %s233 = smul.addr %s230, 2
        %s234 = sadd.s32 %s232, %s233
        %s235 = scalar_lea.vmem %s0, %s234
        %s236 = smul.u32 2, %s22
        %s237 = sadd.s32 %s22, 1
        %s238 = smul.u32 %s237, 2
        %p239 = scmp.lt.s32.totalorder %s238, 1
        %s240 = scalar_select %p239, %s238, 1
        %p241 = scmp.lt.s32.totalorder %s21, 1
        %s242 = scalar_select %p241, %s21, 1
        %p243 = scmp.lt.s32.totalorder %s240, 1
        %s244 = scalar_select %p243, %s240, 1
        %s245 = smul.addr %s242, 2
        %s246 = sadd.s32 %s244, %s245
        %s247 = scalar_lea.vmem %s1, %s246
        %s248 = sadd.s32 %s22, 1
        %s249 = smul.u32 %s248, 2
        %p250 = scmp.lt.s32.totalorder %s249, 1
        %s251 = scalar_select %p250, %s249, 1
        %s252 = smul.u32 2, %s22
        %v253 = vld [vmem:[%s235] sm:$0x3]
        %v254 = vld [vmem:[%s247] sm:$0x1]
        %v256 = vperm.slane %v253, 0
        %v257 = vperm.slane %v253, 1
        %v261 = vrot.slane %v256, 7
        %v262 = vrot.slane %v257, 7
        %v263 = vrot.slane %v254, 7
        %264 = vrot.lane.b32.xlu0 %v261, 127
        %v265 = vpop.permute.xlu0 %264
        %266 = vrot.lane.b32.xlu0 %v262, 127
        %v267 = vpop.permute.xlu0 %266
        %268 = vrot.lane.b32.xlu0 %v263, 127
        %v269 = vpop.permute.xlu0 %268
        %vm270 = vcmask 1039360
        %v271 = vsel %vm270, %v265, %v267
        %v272 = vsel %vm270, %v267, %v269
        %v275 = vrot.slane %v256, 6
        %v276 = vrot.slane %v257, 6
        %v277 = vrot.slane %v254, 6
        %278 = vrot.lane.b32.xlu0 %v275, 126
        %v279 = vpop.permute.xlu0 %278
        %280 = vrot.lane.b32.xlu0 %v276, 126
        %v281 = vpop.permute.xlu0 %280
        %282 = vrot.lane.b32.xlu0 %v277, 126
        %v283 = vpop.permute.xlu0 %282
        %vm284 = vcmask 1031168
        %v285 = vsel %vm284, %v279, %v281
        %v286 = vsel %vm284, %v281, %v283
        %v289 = vrot.slane %v256, 5
        %v290 = vrot.slane %v257, 5
        %v291 = vrot.slane %v254, 5
        %292 = vrot.lane.b32.xlu0 %v289, 125
        %v293 = vpop.permute.xlu0 %292
        %294 = vrot.lane.b32.xlu0 %v290, 125
        %v295 = vpop.permute.xlu0 %294
        %296 = vrot.lane.b32.xlu0 %v291, 125
        %v297 = vpop.permute.xlu0 %296
        %vm298 = vcmask 1022976
        %v299 = vsel %vm298, %v293, %v295
        %v300 = vsel %vm298, %v295, %v297
        %v303 = vrot.slane %v256, 4
        %v304 = vrot.slane %v257, 4
        %v305 = vrot.slane %v254, 4
        %306 = vrot.lane.b32.xlu0 %v303, 124
        %v307 = vpop.permute.xlu0 %306
        %308 = vrot.lane.b32.xlu0 %v304, 124
        %v309 = vpop.permute.xlu0 %308
        %310 = vrot.lane.b32.xlu0 %v305, 124
        %v311 = vpop.permute.xlu0 %310
        %vm312 = vcmask 1014784
        %v313 = vsel %vm312, %v307, %v309
        %v314 = vsel %vm312, %v309, %v311
        %v317 = vrot.slane %v256, 3
        %v318 = vrot.slane %v257, 3
        %v319 = vrot.slane %v254, 3
        %320 = vrot.lane.b32.xlu0 %v317, 123
        %v321 = vpop.permute.xlu0 %320
        %322 = vrot.lane.b32.xlu0 %v318, 123
        %v323 = vpop.permute.xlu0 %322
        %324 = vrot.lane.b32.xlu0 %v319, 123
        %v325 = vpop.permute.xlu0 %324
        %vm326 = vcmask 1006592
        %v327 = vsel %vm326, %v321, %v323
        %v328 = vsel %vm326, %v323, %v325
        %v331 = vrot.slane %v256, 2
        %v332 = vrot.slane %v257, 2
        %v333 = vrot.slane %v254, 2
        %334 = vrot.lane.b32.xlu0 %v331, 122
        %v335 = vpop.permute.xlu0 %334
        %336 = vrot.lane.b32.xlu0 %v332, 122
        %v337 = vpop.permute.xlu0 %336
        %338 = vrot.lane.b32.xlu0 %v333, 122
        %v339 = vpop.permute.xlu0 %338
        %vm340 = vcmask 998400
        %v341 = vsel %vm340, %v335, %v337
        %v342 = vsel %vm340, %v337, %v339
        %v345 = vrot.slane %v256, 1
        %v346 = vrot.slane %v257, 1
        %v347 = vrot.slane %v254, 1
        %348 = vrot.lane.b32.xlu0 %v345, 121
        %v349 = vpop.permute.xlu0 %348
        %350 = vrot.lane.b32.xlu0 %v346, 121
        %v351 = vpop.permute.xlu0 %350
        %352 = vrot.lane.b32.xlu0 %v347, 121
        %v353 = vpop.permute.xlu0 %352
        %vm354 = vcmask 990208
        %v355 = vsel %vm354, %v349, %v351
        %v356 = vsel %vm354, %v351, %v353
        %vm359 = vcmask 1040384
        %v360 = vsel %vm359, %v256, %v271
        %v361 = vsel %vm359, %v257, %v272
        %vm362 = vcmask 1041408
        %v363 = vsel %vm362, %v360, %v285
        %v364 = vsel %vm362, %v361, %v286
        %vm365 = vcmask 1042432
        %v366 = vsel %vm365, %v363, %v299
        %v367 = vsel %vm365, %v364, %v300
        %vm368 = vcmask 1043456
        %v369 = vsel %vm368, %v366, %v313
        %v370 = vsel %vm368, %v367, %v314
        %vm371 = vcmask 1044480
        %v372 = vsel %vm371, %v369, %v327
        %v373 = vsel %vm371, %v370, %v328
        %vm374 = vcmask 1045504
        %v375 = vsel %vm374, %v372, %v341
        %v376 = vsel %vm374, %v373, %v342
        %vm377 = vcmask 1046528
        %v378 = vsel %vm377, %v375, %v355
        %v379 = vsel %vm377, %v376, %v356
        %v380 = vld [vmem:[%s2] sm:$0xff]
        %v388 = vsel %vm359, %v254, %v269
        %v389 = vsel %vm362, %v388, %v283
        %v390 = vsel %vm365, %v389, %v297
        %v391 = vsel %vm368, %v390, %v311
        %v392 = vsel %vm371, %v391, %v325
        %v393 = vsel %vm374, %v392, %v339
        %v394 = vsel %vm377, %v393, %v353
        %396 = vrot.lane.b32.xlu0 %v380, 120
        %v397 = vpop.permute.xlu0 %396
        %401 = vrot.lane.b32.xlu0 %v378, 120
        %v402 = vpop.permute.xlu0 %401
        %403 = vrot.lane.b32.xlu0 %v379, 120
        %v404 = vpop.permute.xlu0 %403
        %405 = vrot.lane.b32.xlu0 %v394, 120
        %v406 = vpop.permute.xlu0 %405
        %vm407 = vcmask 982016
        %v408 = vsel %vm407, %v402, %v404
        %v409 = vsel %vm407, %v404, %v406
        %vm412 = vcmask 64512
        %v413 = vsel %vm412, %v397, 0
        %415 = vmatpush.msra.mxu0 0.0
        %416 = vmatpush.msra.mxu0 0.0
        %417 = vmatpush.msra.mxu0 0.0
        %418 = vmatpush.msra.mxu0 0.0
        %419 = vmatpush.msra.mxu0 0.0
        %420 = vmatpush.msra.mxu0 0.0
        %421 = vmatpush.msra.mxu0 0.0
        %422 = vmatpush.msra.mxu0 0.0
        %423 = vmatpush.msra.mxu0 0.0
        %424 = vmatpush.msra.mxu0 0.0
        %425 = vmatpush.msra.mxu0 0.0
        %426 = vmatpush.msra.mxu0 0.0
        %427 = vmatpush.msra.mxu0 0.0
        %428 = vmatpush.msra.mxu0 0.0
        %429 = vmatpush.msra.mxu0 0.0
        %430 = vmatpush.msra.mxu0 %v408
        %431 = vmatmul.f32.gmra.mxu0 %v413
        %v432 = vpop.f32.mrf.mxu0
        %v433 = vadd.f32 0.0, %v432
        %434 = vdwg.mxu0
        %435 = vmatpush.msra.mxu0 0.0
        %436 = vmatpush.msra.mxu0 0.0
        %437 = vmatpush.msra.mxu0 0.0
        %438 = vmatpush.msra.mxu0 0.0
        %439 = vmatpush.msra.mxu0 0.0
        %440 = vmatpush.msra.mxu0 0.0
        %441 = vmatpush.msra.mxu0 0.0
        %442 = vmatpush.msra.mxu0 0.0
        %443 = vmatpush.msra.mxu0 0.0
        %444 = vmatpush.msra.mxu0 0.0
        %445 = vmatpush.msra.mxu0 0.0
        %446 = vmatpush.msra.mxu0 0.0
        %447 = vmatpush.msra.mxu0 0.0
        %448 = vmatpush.msra.mxu0 0.0
        %449 = vmatpush.msra.mxu0 0.0
        %450 = vmatpush.msra.mxu0 %v409
        %451 = vmatmul.f32.gmra.mxu0 %v413
        %v452 = vpop.f32.mrf.mxu0
        %v453 = vadd.f32 0.0, %v452
        %454 = vdwg.mxu0
        %v455 = vsel %vm412, %v380, 0
        %457 = vmatpush.msra.mxu0 0.0
        %458 = vmatpush.msra.mxu0 0.0
        %459 = vmatpush.msra.mxu0 0.0
        %460 = vmatpush.msra.mxu0 0.0
        %461 = vmatpush.msra.mxu0 0.0
        %462 = vmatpush.msra.mxu0 0.0
        %463 = vmatpush.msra.mxu0 0.0
        %464 = vmatpush.msra.mxu0 0.0
        %465 = vmatpush.msra.mxu0 0.0
        %466 = vmatpush.msra.mxu0 0.0
        %467 = vmatpush.msra.mxu0 0.0
        %468 = vmatpush.msra.mxu0 0.0
        %469 = vmatpush.msra.mxu0 0.0
        %470 = vmatpush.msra.mxu0 0.0
        %471 = vmatpush.msra.mxu0 0.0
        %472 = vmatpush.msra.mxu0 %v378
        %473 = vmatmul.f32.gmra.mxu0 %v455
        %v474 = vpop.f32.mrf.mxu0
        %v475 = vadd.f32 %v433, %v474
        %476 = vdwg.mxu0
        %477 = vmatpush.msra.mxu0 0.0
        %478 = vmatpush.msra.mxu0 0.0
        %479 = vmatpush.msra.mxu0 0.0
        %480 = vmatpush.msra.mxu0 0.0
        %481 = vmatpush.msra.mxu0 0.0
        %482 = vmatpush.msra.mxu0 0.0
        %483 = vmatpush.msra.mxu0 0.0
        %484 = vmatpush.msra.mxu0 0.0
        %485 = vmatpush.msra.mxu0 0.0
        %486 = vmatpush.msra.mxu0 0.0
        %487 = vmatpush.msra.mxu0 0.0
        %488 = vmatpush.msra.mxu0 0.0
        %489 = vmatpush.msra.mxu0 0.0
        %490 = vmatpush.msra.mxu0 0.0
        %491 = vmatpush.msra.mxu0 0.0
        %492 = vmatpush.msra.mxu0 %v379
        %493 = vmatmul.f32.gmra.mxu0 %v455
        %v494 = vpop.f32.mrf.mxu0
        %v495 = vadd.f32 %v453, %v494
        %496 = vdwg.mxu0
        %497 = vrot.lane.b32.xlu0 %v380, 112
        %v498 = vpop.permute.xlu0 %497
        %499 = vrot.lane.b32.xlu0 %v378, 112
        %v500 = vpop.permute.xlu0 %499
        %501 = vrot.lane.b32.xlu0 %v379, 112
        %v502 = vpop.permute.xlu0 %501
        %503 = vrot.lane.b32.xlu0 %v394, 112
        %v504 = vpop.permute.xlu0 %503
        %vm505 = vcmask 916480
        %v506 = vsel %vm505, %v500, %v502
        %v507 = vsel %vm505, %v502, %v504
        %v510 = vsel %vm412, %v498, 0
        %512 = vmatpush.msra.mxu0 0.0
        %513 = vmatpush.msra.mxu0 0.0
        %514 = vmatpush.msra.mxu0 0.0
        %515 = vmatpush.msra.mxu0 0.0
        %516 = vmatpush.msra.mxu0 0.0
        %517 = vmatpush.msra.mxu0 0.0
        %518 = vmatpush.msra.mxu0 0.0
        %519 = vmatpush.msra.mxu0 0.0
        %520 = vmatpush.msra.mxu0 0.0
        %521 = vmatpush.msra.mxu0 0.0
        %522 = vmatpush.msra.mxu0 0.0
        %523 = vmatpush.msra.mxu0 0.0
        %524 = vmatpush.msra.mxu0 0.0
        %525 = vmatpush.msra.mxu0 0.0
        %526 = vmatpush.msra.mxu0 0.0
        %527 = vmatpush.msra.mxu0 %v506
        %528 = vmatmul.f32.gmra.mxu0 %v510
        %v529 = vpop.f32.mrf.mxu0
        %v530 = vadd.f32 0.0, %v529
        %531 = vdwg.mxu0
        %532 = vmatpush.msra.mxu0 0.0
        %533 = vmatpush.msra.mxu0 0.0
        %534 = vmatpush.msra.mxu0 0.0
        %535 = vmatpush.msra.mxu0 0.0
        %536 = vmatpush.msra.mxu0 0.0
        %537 = vmatpush.msra.mxu0 0.0
        %538 = vmatpush.msra.mxu0 0.0
        %539 = vmatpush.msra.mxu0 0.0
        %540 = vmatpush.msra.mxu0 0.0
        %541 = vmatpush.msra.mxu0 0.0
        %542 = vmatpush.msra.mxu0 0.0
        %543 = vmatpush.msra.mxu0 0.0
        %544 = vmatpush.msra.mxu0 0.0
        %545 = vmatpush.msra.mxu0 0.0
        %546 = vmatpush.msra.mxu0 0.0
        %547 = vmatpush.msra.mxu0 %v507
        %548 = vmatmul.f32.gmra.mxu0 %v510
        %v549 = vpop.f32.mrf.mxu0
        %v550 = vadd.f32 0.0, %v549
        %551 = vdwg.mxu0
        %v552 = vadd.f32 %v475, %v530
        %v553 = vadd.f32 %v495, %v550
        %554 = vrot.lane.b32.xlu0 %v256, 120
        %v555 = vpop.permute.xlu0 %554
        %556 = vrot.lane.b32.xlu0 %v257, 120
        %v557 = vpop.permute.xlu0 %556
        %558 = vrot.lane.b32.xlu0 %v254, 120
        %v559 = vpop.permute.xlu0 %558
        %v560 = vsel %vm407, %v555, %v557
        %v561 = vsel %vm407, %v557, %v559
        %562 = vrot.lane.b32.xlu0 %v380, 104
        %v563 = vpop.permute.xlu0 %562
        %564 = vrot.lane.b32.xlu0 %v378, 104
        %v565 = vpop.permute.xlu0 %564
        %566 = vrot.lane.b32.xlu0 %v379, 104
        %v567 = vpop.permute.xlu0 %566
        %568 = vrot.lane.b32.xlu0 %v394, 104
        %v569 = vpop.permute.xlu0 %568
        %570 = vrot.lane.b32.xlu0 %v560, 104
        %v571 = vpop.permute.xlu0 %570
        %572 = vrot.lane.b32.xlu0 %v561, 104
        %v573 = vpop.permute.xlu0 %572
        %574 = vrot.lane.b32.xlu0 %v559, 104
        %v575 = vpop.permute.xlu0 %574
        %vm576 = vcmask 850944
        %v577 = vsel %vm576, %v565, %v567
        %v578 = vsel %vm576, %v567, %v569
        %v579 = vsel %vm576, %v571, %v573
        %v580 = vsel %vm576, %v573, %v575
        %vm583 = vcmask 72704
        %v584 = vsel %vm583, %v563, 0
        %v586 = vsel %vm359, %v579, 0
        %v588 = vsel %vm359, %v580, 0
        %590 = vmatpush.msra.mxu0 0.0
        %591 = vmatpush.msra.mxu0 0.0
        %592 = vmatpush.msra.mxu0 0.0
        %593 = vmatpush.msra.mxu0 0.0
        %594 = vmatpush.msra.mxu0 0.0
        %595 = vmatpush.msra.mxu0 0.0
        %596 = vmatpush.msra.mxu0 0.0
        %597 = vmatpush.msra.mxu0 0.0
        %598 = vmatpush.msra.mxu0 0.0
        %599 = vmatpush.msra.mxu0 0.0
        %600 = vmatpush.msra.mxu0 0.0
        %601 = vmatpush.msra.mxu0 0.0
        %602 = vmatpush.msra.mxu0 0.0
        %603 = vmatpush.msra.mxu0 0.0
        %604 = vmatpush.msra.mxu0 %v586
        %605 = vmatpush.msra.mxu0 %v577
        %606 = vmatmul.f32.gmra.mxu0 %v584
        %v607 = vpop.f32.mrf.mxu0
        %v608 = vadd.f32 0.0, %v607
        %609 = vdwg.mxu0
        %610 = vmatpush.msra.mxu0 0.0
        %611 = vmatpush.msra.mxu0 0.0
        %612 = vmatpush.msra.mxu0 0.0
        %613 = vmatpush.msra.mxu0 0.0
        %614 = vmatpush.msra.mxu0 0.0
        %615 = vmatpush.msra.mxu0 0.0
        %616 = vmatpush.msra.mxu0 0.0
        %617 = vmatpush.msra.mxu0 0.0
        %618 = vmatpush.msra.mxu0 0.0
        %619 = vmatpush.msra.mxu0 0.0
        %620 = vmatpush.msra.mxu0 0.0
        %621 = vmatpush.msra.mxu0 0.0
        %622 = vmatpush.msra.mxu0 0.0
        %623 = vmatpush.msra.mxu0 0.0
        %624 = vmatpush.msra.mxu0 %v588
        %625 = vmatpush.msra.mxu0 %v578
        %626 = vmatmul.f32.gmra.mxu0 %v584
        %v627 = vpop.f32.mrf.mxu0
        %v628 = vadd.f32 0.0, %v627
        %629 = vdwg.mxu0
        %v630 = vadd.f32 %v552, %v608
        %v631 = vadd.f32 %v553, %v628
        %632 = vst [vmem:[%s227] sm:$0xff] %v630
        %633 = vst [vmem:[%s227 + $0x8] sm:$0xff] %v631
        %s634 = sand.u32 %s124, 1
        %s635 = scalar_lea.sflag [#allocation3], %s634
        %s636 = sand.u32 %s124, 1
        %s637 = smul.addr %s636, 16
        %s638 = scalar_lea.vmem [#allocation2], %s637
        // Predicated region
        $region33: #{a_call__.1} parent=31 // pred_check
          %p639 = pneg %p134
        $region34: #{a_call__.1} parent=31 // pred_check_branch
          %641 = sbr.rel (%p639) target = $region36
        $region35: #{a_call__.1} parent=31 // pred_region
          %s642 = smul.u32 2, %s22
          %644 = vsyncadd %s635, 0
          %s645 = smul.addr %s21, 2
          %s646 = sadd.s32 %s642, %s645
          %s647 = smul.addr %s646, 8
          %s648 = scalar_lea.hbm %s3, %s647
          %s650 = sshll.u32 %s638, 4
          %s651 = int_to_ptr.vmem [resolvable:$true] %s650
          %s652 = sshll.u32 %s648, 4
          %s653 = int_to_ptr.hbm [resolvable:$true] %s652
          %655 = dma.vmem_to_hbm [thread:$0]  %s651, 256, %s653, %s635
        $region36: #{a_call__.1} parent=31 // pred_fallthru
          _
      $region32: #{a_call__.1} parent=5 // pred_fallthru
        _
      %p656 = scmp.le.s32.totalorder 2, %s12
      // Predicated region
      $region37: #{a_call__.1} parent=5 // pred_check
        %p657 = pneg %p656
      $region38: #{a_call__.1} parent=5 // pred_check_branch
        %659 = sbr.rel (%p657) target = $region40
      $region39: #{a_call__.1} parent=5 // pred_region
        %s660 = ssub.s32 %s12, 2
        // Predicated region
        $region41: #{a_call__.1} parent=39 // pred_check
          %p661 = pneg %p140
        $region42: #{a_call__.1} parent=39 // pred_check_branch
          %663 = sbr.rel (%p661) target = $region44
        $region43: #{a_call__.1} parent=39 // pred_region
          %s664 = sand.u32 %s125, 1
          %s665 = scalar_lea.sflag [#allocation3], %s664
          %s666 = sand.u32 %s125, 1
          %s667 = smul.addr %s666, 16
          %s668 = scalar_lea.vmem [#allocation2], %s667
          %670 = dma.done %s665, 256
        $region44: #{a_call__.1} parent=39 // pred_fallthru
          _
      $region40: #{a_call__.1} parent=5 // pred_fallthru
        _
    $region6: #{a_call__.1} parent=1 // loop_footer
      %s16 = sadd.s32 1, %s12
    $region7: #{a_call__.1} parent=1 // loop_footer_branch
      %11 = sbr.rel target = $region3
    $region8: #{a_call__.1} parent=1 // loop_exit
      _
    %671 = vsyncpa [#allocation3], 1
    %s672 = scalar_lea.sflag [#allocation3], 1
    %673 = vsyncpa %s672, 1

</llo_original>
